<compile_context>
chip_gen: v6e
topology: v6e:2x2x1
jax: 0.10.0
libtpu: 0.0.40
codegen_flags: <defaults>
</compile_context>

<pallas_src>
import functools

import jax
import jax.numpy as jnp
from jax.experimental import pallas as pl
from jax.experimental.pallas import tpu as pltpu


# ----------------------------------------------------------------------------
# Helpers
# ----------------------------------------------------------------------------
def _round_up(x: int, m: int) -> int:
    return ((x + m - 1) // m) * m


def _pick_hidden_tile(hidden: int, preferred: int = 512, align: int = 128) -> int:
    """Largest tile <= preferred that divides `hidden` and is `align`-aligned."""
    if hidden <= preferred:
        return hidden
    t = (preferred // align) * align
    while t >= align:
        if hidden % t == 0:
            return t
        t -= align
    return hidden  # fallback: no nice divisor, use full hidden


def _hw_info():
    """Best-effort TPU generation + physical VMEM capacity (bytes)."""
    kind = ""
    try:
        kind = (getattr(jax.devices()[0], "device_kind", "") or "").lower()
    except Exception:
        pass
    vmem_cap = 128 << 20
    try:
        vmem_cap = int(pltpu.get_tpu_info().vmem_capacity_bytes)
    except Exception:
        if "v7" in kind or "7x" in kind:
            vmem_cap = 64 << 20
    return kind, vmem_cap


def _default_token_tile(kind: str, act_itemsize: int) -> int:
    """Per-generation default tm (multiple of 128)."""
    if "v7" in kind or "7x" in kind:
        return 512          # 3.2 TB/s HBM: ~310 FLOP/B break-even
    if "v6" in kind:
        return 1024 if act_itemsize <= 2 else 768
    if "v5" in kind:
        return 512 if act_itemsize <= 2 else 768
    return 512


def _needed_vmem(tm, tn, dim, x_ib, w_ib, o_ib, use_scratch_acc) -> int:
    n = 0
    n += 2 * tm * dim * x_ib            # x tile (double-buffered)
    n += 2 * dim * (2 * tn) * w_ib      # packed W1|W3 tile
    n += 2 * tn * dim * w_ib            # W2^T tile
    n += 2 * tm * dim * o_ib            # output tile
    if use_scratch_acc:
        n += tm * dim * 4               # f32 accumulator scratch
    return n


# ----------------------------------------------------------------------------
# One-time weight preparation (parameter-creation time, NOT per forward call)
# ----------------------------------------------------------------------------
def prepare_ffn_weights(w1, w2, w3, *, tn=None, weight_dtype=None):
    """
    w1, w3: [hidden, dim]   (PyTorch nn.Linear layout: out x in)
    w2    : [dim, hidden]

    Returns (tile-major layouts; each weight tile is one contiguous HBM slab):
      w13 : [n_tiles, dim, 2*tn]  -- per hidden tile, [W1^T tile | W3^T tile]
      w2t : [n_tiles, tn, dim]    -- W2^T split per hidden tile.
    The hidden tile size `tn` is carried by the shapes, so the kernel cannot
    be called with a mismatched tn.
    """
    hidden, dim = w1.shape
    assert w3.shape == (hidden, dim) and w2.shape == (dim, hidden)
    if tn is None:
        tn = _pick_hidden_tile(hidden)
    assert hidden % tn == 0, "tn must divide hidden (use _pick_hidden_tile)"
    nt = hidden // tn
    wd = weight_dtype if weight_dtype is not None else w1.dtype

    w1_t = jnp.transpose(w1).reshape(dim, nt, tn).astype(wd)   # (dim, nt, tn)
    w3_t = jnp.transpose(w3).reshape(dim, nt, tn).astype(wd)
    w13 = jnp.concatenate([w1_t, w3_t], axis=2)                # (dim, nt, 2tn)
    w13 = jnp.transpose(w13, (1, 0, 2))                        # (nt, dim, 2tn)
    w2t = jnp.transpose(w2).reshape(nt, tn, dim).astype(wd)    # (nt, tn, dim)
    return w13, w2t


# ----------------------------------------------------------------------------
# Kernel: grid = (token tiles, hidden tiles)   [hidden = reduction, last axis]
#   per step:  h13 = x_tile @ W13_tile          (tm, 2*tn)  one MXU matmul
#              a   = silu(h13[:, :tn]) * h13[:, tn:]        f32 epilogue
#              acc += a @ W2^T_tile              (tm, dim)  f32 accumulation
# For f32 outputs the VMEM-resident (revisited) output block IS the
# accumulator; bf16 outputs use a dedicated f32 scratch.
# ----------------------------------------------------------------------------
def _ffn_kernel(x_ref, w13_ref, w2_ref, o_ref, *scratch, acc_in_out):
    n = pl.program_id(1)
    acc_ref = o_ref if acc_in_out else scratch[0]

    tn = w2_ref.shape[0]
    x = x_ref[...]                                           # (tm, dim)
    if x.dtype != w13_ref.dtype:
        x = x.astype(w13_ref.dtype)                          # e.g. f32 act, bf16 weights
    h13 = jnp.dot(x, w13_ref[...],
                  preferred_element_type=jnp.float32)        # (tm, 2*tn)
    h = h13[:, :tn]
    g = h13[:, tn:]
    a = (h * jax.nn.sigmoid(h)) * g                          # SiLU * up, f32

    part = jnp.dot(a.astype(w2_ref.dtype), w2_ref[...],
                   preferred_element_type=jnp.float32)       # (tm, dim), f32

    @pl.when(n == 0)
    def _init():
        acc_ref[...] = part

    @pl.when(n > 0)
    def _accumulate():
        acc_ref[...] += part

    if not acc_in_out:
        @pl.when(n == pl.num_programs(1) - 1)
        def _store():
            o_ref[...] = acc_ref[...].astype(o_ref.dtype)


# ----------------------------------------------------------------------------
# Wrapper
# ----------------------------------------------------------------------------
def feed_forward_pallas(x, w13, w2t, *, token_tile=None, vmem_limit_bytes=None):
    """
    x   : [..., dim]
    w13 : [n_tiles, dim, 2*tn]  (from prepare_ffn_weights)
    w2t : [n_tiles, tn, dim]
    """
    orig_shape = x.shape
    dim = orig_shape[-1]

    nt, dim_w13, two_tn = w13.shape
    nt2, tn, dim_w2 = w2t.shape
    assert nt == nt2 and dim_w13 == dim and dim_w2 == dim and two_tn == 2 * tn, \
        "packed weight shapes inconsistent with x / each other"

    x2d = x.reshape(-1, dim)
    T = x2d.shape[0]

    kind, vmem_cap = _hw_info()
    x_ib = jnp.dtype(x.dtype).itemsize
    w_ib = jnp.dtype(w13.dtype).itemsize
    o_ib = x_ib

    # f32 outputs accumulate directly in the output block (saves tm*dim*4 VMEM).
    acc_in_out = (x.dtype == jnp.float32)
    use_scratch_acc = not acc_in_out

    # ----- token tile -----
    tm = token_tile if token_tile is not None else _default_token_tile(kind, x_ib)
    tm = min(tm, _round_up(T, 8))                 # never larger than (aligned) T
    tm = max(8, _round_up(tm, 8))

    # ----- VMEM budget (physical capacity aware; no blanket +16 MiB) -----
    budget = min(int(vmem_cap * 0.85), 112 << 20)
    while tm > 128 and _needed_vmem(tm, tn, dim, x_ib, w_ib, o_ib,
                                    use_scratch_acc) > budget:
        tm = max(128, tm // 2)
    needed = _needed_vmem(tm, tn, dim, x_ib, w_ib, o_ib, use_scratch_acc)
    if vmem_limit_bytes is None:
        vmem_limit_bytes = max(needed + (4 << 20), 32 << 20)
        vmem_limit_bytes = min(vmem_limit_bytes, vmem_cap)

    # ----- ragged T: only a tiny pad to the sublane multiple (8); the token
    #       grid uses pl.cdiv with partial boundary blocks, no pad to tm -----
    T_eff = _round_up(T, 8)
    if T_eff != T:
        x2d = jnp.pad(x2d, ((0, T_eff - T), (0, 0)))

    grid = (pl.cdiv(T_eff, tm), nt)

    scratch_shapes = [] if acc_in_out else [pltpu.VMEM((tm, dim), jnp.float32)]

    out = pl.pallas_call(
        functools.partial(_ffn_kernel, acc_in_out=acc_in_out),
        out_shape=jax.ShapeDtypeStruct((T_eff, dim), x.dtype),
        grid_spec=pltpu.PrefetchScalarGridSpec(
            num_scalar_prefetch=0,
            grid=grid,
            in_specs=[
                # x tile, held across the hidden (reduction) axis
                pl.BlockSpec((tm, dim), lambda i, n: (i, 0)),
                # packed W1|W3 tile: contiguous [dim, 2*tn] slab per hidden tile
                pl.BlockSpec((None, dim, 2 * tn), lambda i, n: (n, 0, 0)),
                # W2^T tile: contiguous [tn, dim] slab per hidden tile
                pl.BlockSpec((None, tn, dim), lambda i, n: (n, 0, 0)),
            ],
            out_specs=pl.BlockSpec((tm, dim), lambda i, n: (i, 0)),  # revisited over n
            scratch_shapes=scratch_shapes,
        ),
        compiler_params=pltpu.CompilerParams(
            dimension_semantics=("parallel", "arbitrary"),
            vmem_limit_bytes=int(vmem_limit_bytes),
        ),
    )(x2d, w13, w2t)

    if T_eff != T:
        out = out[:T]
    return out.reshape(orig_shape)


def feed_forward(x, w1, w2, w3, *, token_tile=None, hidden_tile=None,
                 weight_dtype=None):
    """Convenience wrapper taking PyTorch-layout weights (packs per call;
    production code should call prepare_ffn_weights once instead)."""
    hidden = w1.shape[0]
    kind, _ = _hw_info()
    if hidden_tile is None:
        hidden_tile = 256 if ("v7" in kind or "7x" in kind) else 512
    tn = _pick_hidden_tile(hidden, preferred=hidden_tile)
    w13, w2t = prepare_ffn_weights(w1, w2, w3, tn=tn, weight_dtype=weight_dtype)
    return feed_forward_pallas(x, w13, w2t, token_tile=token_tile)


# ----------------------------------------------------------------------------
# Parameter construction mirroring FeedForward.__init__ / init_weights
# (the PyTorch module hard-codes std=0.02 for w1 and uses init_std for w2/w3).
# ----------------------------------------------------------------------------
def make_ffn_params(key, dim, hidden_dim, multiple_of, ffn_dim_multiplier=None,
                    init_std=0.02, dtype=jnp.float32):
    hidden_dim = int(2 * hidden_dim / 3)
    if ffn_dim_multiplier is not None:
        hidden_dim = int(ffn_dim_multiplier * hidden_dim)
    hidden_dim = multiple_of * ((hidden_dim + multiple_of - 1) // multiple_of)

    k1, k2, k3 = jax.random.split(key, 3)
    w1 = (jax.random.truncated_normal(k1, -2.0, 2.0, (hidden_dim, dim)) * 0.02).astype(dtype)
    w2 = (jax.random.truncated_normal(k2, -2.0, 2.0, (dim, hidden_dim)) * init_std).astype(dtype)
    w3 = (jax.random.truncated_normal(k3, -2.0, 2.0, (hidden_dim, dim)) * init_std).astype(dtype)
    return w1, w2, w3, hidden_dim


def _reference(x, w1, w2, w3):
    h = x @ w1.T
    g = x @ w3.T
    a = (h * jax.nn.sigmoid(h)) * g
    return a @ w2.T


if __name__ == "__main__":
    key = jax.random.PRNGKey(0)
    kx, kw = jax.random.split(key)

    # Small shapes consistent with the module: dim=128, 4*dim hidden proposal.
    batch, seq, dim = 2, 8, 128
    hidden_proposal = 4 * dim
    multiple_of = 128

    w1, w2, w3, hidden_dim = make_ffn_params(
        kw, dim, hidden_proposal, multiple_of, ffn_dim_multiplier=None,
        init_std=0.02, dtype=jnp.float32,
    )
    x = jax.random.normal(kx, (batch, seq, dim), dtype=jnp.float32)

    # One-time weight prep (tile-major packed layout carries tn implicitly).
    tn = _pick_hidden_tile(hidden_dim)
    w13, w2t = prepare_ffn_weights(w1, w2, w3, tn=tn)
    ref = _reference(x, w1, w2, w3)

    # f32 path (accumulates directly in the output block, no scratch).
    out = jax.block_until_ready(feed_forward_pallas(x, w13, w2t))
    assert out.shape == x.shape
    assert jnp.allclose(out, ref, atol=1e-4, rtol=1e-4), "f32 mismatch vs reference"

    # Convenience wrapper (packs per call) must agree too.
    out_c = jax.block_until_ready(feed_forward(x, w1, w2, w3))
    assert jnp.allclose(out_c, ref, atol=1e-4, rtol=1e-4), "wrapper mismatch"

    # Ragged token count (exercises the partial-block / tiny-pad path).
    x_r = jax.random.normal(jax.random.PRNGKey(1), (2, 7, dim), dtype=jnp.float32)
    out_r = jax.block_until_ready(feed_forward_pallas(x_r, w13, w2t))
    ref_r = _reference(x_r, w1, w2, w3)
    assert out_r.shape == x_r.shape
    assert jnp.allclose(out_r, ref_r, atol=1e-4, rtol=1e-4), "ragged mismatch"

    # bf16 activations + weights (f32 accumulation via scratch), loose tolerance.
    xb = x.astype(jnp.bfloat16)
    w13_b, w2t_b = prepare_ffn_weights(w1, w2, w3, tn=tn, weight_dtype=jnp.bfloat16)
    out_b = jax.block_until_ready(feed_forward_pallas(xb, w13_b, w2t_b))
    assert out_b.dtype == jnp.bfloat16
    err_b = float(jnp.max(jnp.abs(out_b.astype(jnp.float32) - ref)))
    assert jnp.isfinite(err_b) and err_b < 5e-2, "bf16 path diverged"

    # Mixed path: f32 activations with bf16 weights (MXU runs in bf16,
    # f32 accumulation + f32 SiLU epilogue preserved), loose tolerance.
    out_m = jax.block_until_ready(feed_forward_pallas(x, w13_b, w2t_b))
    assert out_m.dtype == jnp.float32
    err_m = float(jnp.max(jnp.abs(out_m - ref)))
    assert jnp.isfinite(err_m) and err_m < 5e-2, "bf16-weight path diverged"

    print("KERNEL_OK")
</pallas_src>

<mosaic_0001>
module attributes {stable_mosaic.version = 11 : i64} {
  func.func @_ffn_kernel(%arg0: i32, %arg1: i32, %arg2: memref<16x128xf32, #tpu.memory_space<vmem>>, %arg3: memref<1x128x768xf32, #tpu.memory_space<vmem>>, %arg4: memref<1x384x128xf32, #tpu.memory_space<vmem>>, %arg5: memref<16x128xf32, #tpu.memory_space<vmem>>) attributes {dimension_semantics = [#tpu.dimension_semantics<parallel>, #tpu.dimension_semantics<arbitrary>], iteration_bounds = array<i64: 1, 1>, scalar_prefetch = 0 : i64, scratch_operands = 0 : i64, tpu.core_type = #tpu.core_type<tc>, window_params = [{transform_indices = @transform_0, window_bounds = array<i64: 16, 128>}, {transform_indices = @transform_1, window_bounds = array<i64: 1, 128, 768>}, {transform_indices = @transform_2, window_bounds = array<i64: 1, 384, 128>}, {transform_indices = @transform_3, window_bounds = array<i64: 16, 128>}]} {
    %c0 = arith.constant 0 : index
    %c0_0 = arith.constant 0 : index
    %0 = vector.load %arg2[%c0, %c0_0] : memref<16x128xf32, #tpu.memory_space<vmem>>, vector<16x128xf32>
    %c0_1 = arith.constant 0 : index
    %c0_2 = arith.constant 0 : index
    %c0_3 = arith.constant 0 : index
    %1 = vector.load %arg3[%c0_1, %c0_2, %c0_3] : memref<1x128x768xf32, #tpu.memory_space<vmem>>, vector<1x128x768xf32>
    %2 = vector.shape_cast %1 : vector<1x128x768xf32> to vector<128x768xf32>
    %cst = arith.constant dense<0.000000e+00> : vector<16x768xf32>
    %3 = tpu.matmul %0, %2, %cst {dimension_numbers = #tpu.dot_dimension_numbers<[1], [0], [0], [1], [0, 0, 1, 1], [], []>} : vector<16x128xf32>, vector<128x768xf32>, vector<16x768xf32> -> vector<16x768xf32>
    %4 = vector.extract_strided_slice %3 {offsets = [0, 0], sizes = [16, 384], strides = [1, 1]} : vector<16x768xf32> to vector<16x384xf32>
    %5 = vector.extract_strided_slice %3 {offsets = [0, 384], sizes = [16, 384], strides = [1, 1]} : vector<16x768xf32> to vector<16x384xf32>
    %6 = arith.negf %4 : vector<16x384xf32>
    %7 = math.exp %6 : vector<16x384xf32>
    %cst_4 = arith.constant 1.000000e+00 : f32
    %8 = vector.broadcast %cst_4 : f32 to vector<16x384xf32>
    %9 = arith.addf %8, %7 : vector<16x384xf32>
    %10 = arith.divf %8, %9 : vector<16x384xf32>
    %11 = arith.mulf %4, %10 : vector<16x384xf32>
    %12 = arith.mulf %11, %5 : vector<16x384xf32>
    %c0_5 = arith.constant 0 : index
    %c0_6 = arith.constant 0 : index
    %c0_7 = arith.constant 0 : index
    %13 = vector.load %arg4[%c0_5, %c0_6, %c0_7] : memref<1x384x128xf32, #tpu.memory_space<vmem>>, vector<1x384x128xf32>
    %14 = vector.shape_cast %13 : vector<1x384x128xf32> to vector<384x128xf32>
    %cst_8 = arith.constant dense<0.000000e+00> : vector<16x128xf32>
    %15 = tpu.matmul %12, %14, %cst_8 {dimension_numbers = #tpu.dot_dimension_numbers<[1], [0], [0], [1], [0, 0, 1, 1], [], []>} : vector<16x384xf32>, vector<384x128xf32>, vector<16x128xf32> -> vector<16x128xf32>
    %c0_i32 = arith.constant 0 : i32
    %16 = arith.cmpi eq, %arg1, %c0_i32 : i32
    %17 = arith.extui %16 : i1 to i32
    %c0_i32_9 = arith.constant 0 : i32
    %18 = arith.cmpi ne, %17, %c0_i32_9 : i32
    scf.if %18 {
      %c0_12 = arith.constant 0 : index
      %c0_13 = arith.constant 0 : index
      %22 = vector.load %arg5[%c0_12, %c0_13] : memref<16x128xf32, #tpu.memory_space<vmem>>, vector<16x128xf32>
      tpu.vector_store %arg5[%c0_12, %c0_13], %15 {strides = array<i32>} : memref<16x128xf32, #tpu.memory_space<vmem>>, vector<16x128xf32>,
    } else {
    }
    %c0_i32_10 = arith.constant 0 : i32
    %19 = arith.cmpi sgt, %arg1, %c0_i32_10 : i32
    %20 = arith.extui %19 : i1 to i32
    %c0_i32_11 = arith.constant 0 : i32
    %21 = arith.cmpi ne, %20, %c0_i32_11 : i32
    scf.if %21 {
      %c0_12 = arith.constant 0 : index
      %c0_13 = arith.constant 0 : index
      %22 = vector.load %arg5[%c0_12, %c0_13] : memref<16x128xf32, #tpu.memory_space<vmem>>, vector<16x128xf32>
      %23 = arith.addf %22, %15 : vector<16x128xf32>
      %c0_14 = arith.constant 0 : index
      %c0_15 = arith.constant 0 : index
      %24 = vector.load %arg5[%c0_14, %c0_15] : memref<16x128xf32, #tpu.memory_space<vmem>>, vector<16x128xf32>
      tpu.vector_store %arg5[%c0_14, %c0_15], %23 {strides = array<i32>} : memref<16x128xf32, #tpu.memory_space<vmem>>, vector<16x128xf32>,
    } else {
    }
    return
  }
  func.func @transform_0(%arg0: i32, %arg1: i32) -> (i32, i32) {
    %c0_i32 = arith.constant 0 : i32
    %c0_i32_0 = arith.constant 0 : i32
    return %arg0, %c0_i32 : i32, i32
  }
  func.func @transform_1(%arg0: i32, %arg1: i32) -> (i32, i32, i32) {
    %c0_i32 = arith.constant 0 : i32
    %c0_i32_0 = arith.constant 0 : i32
    %c0_i32_1 = arith.constant 0 : i32
    return %arg1, %c0_i32, %c0_i32_0 : i32, i32, i32
  }
  func.func @transform_2(%arg0: i32, %arg1: i32) -> (i32, i32, i32) {
    %c0_i32 = arith.constant 0 : i32
    %c0_i32_0 = arith.constant 0 : i32
    %c0_i32_1 = arith.constant 0 : i32
    return %arg1, %c0_i32, %c0_i32_0 : i32, i32, i32
  }
  func.func @transform_3(%arg0: i32, %arg1: i32) -> (i32, i32) {
    %c0_i32 = arith.constant 0 : i32
    %c0_i32_0 = arith.constant 0 : i32
    return %arg0, %c0_i32 : i32, i32
  }
}

</mosaic_0001>

<llo_original>
// kernel: tpu_custom_call.1
$region0: #{tpu_custom_call.1}
  #allocation0 [shape = 'u32[]', space=smem, size = 0x4, offset = 0x4, fixed_abs, tag = 'smem constant byte address 0x4 - core index']
  #allocation1 [shape = 'u32[144,128]{1,0:T(1,128)}', space=vmem, size = 0x12000, scoped, tag = 'internal scratch']
  %s0 = inlined_call_operand.hbm [shape: f32[16,128], index: 0, kind: input, shape index: {}]
  %s1 = inlined_call_operand.hbm [shape: f32[1,128,768], index: 1, kind: input, shape index: {}]
  %s2 = inlined_call_operand.hbm [shape: f32[1,384,128], index: 2, kind: input, shape index: {}]
  %s3 = inlined_call_operand.hbm [shape: f32[16,128], index: 3, kind: output, shape index: {}]
  %s4 = sld [smem:[#allocation0]]
  $region42: #{tpu_custom_call.1} parent=0
    _
  %s6 = ssub.s32 1, %s4
  %s7 = scalar_select 0, %s6, %s4
  $region1: #{tpu_custom_call.1} parent=0
    #allocation2 [shape = 'u8[8192]{0}', space=vmem, size = 0x2000, scoped, tag = 'input window, operand 0, single buffered']
    #allocation3 [shape = 's32[1]{0}', space=sflag, size = 0x4, scoped, tag = 'scoped memory for tpu_custom_call.1']
    #allocation4 [shape = 's32[1]{0}', space=sflag, size = 0x4, scoped, tag = 'scoped memory for tpu_custom_call.1']
    #allocation5 [shape = 'u8[393216]{0}', space=vmem, size = 0x60000, scoped, tag = 'input window, operand 1, single buffered']
    #allocation6 [shape = 's32[1]{0}', space=sflag, size = 0x4, scoped, tag = 'scoped memory for tpu_custom_call.1']
    #allocation7 [shape = 'u8[196608]{0}', space=vmem, size = 0x30000, scoped, tag = 'input window, operand 2, single buffered']
    #allocation8 [shape = 'u8[8192]{0}', space=vmem, size = 0x2000, scoped, tag = 'output window, operand 0, single buffered']
    %8 = vsyncpa [#allocation3], 0
    %9 = vsyncpa [#allocation6], 0
    %10 = vsyncpa [#allocation4], 0
    // Predicated region
    $region2: #{tpu_custom_call.1} parent=1 // pred_check
      _
    $region3: #{tpu_custom_call.1} parent=1 // pred_check_branch
      %12 = sbr.rel (0) target = $region5
    $region4: #{tpu_custom_call.1} parent=1 // pred_region
      %s14 = ssub.s32 256, 256
      %15 = vsyncadd [#allocation3], %s14
      %s16 = sshll.u32 [#allocation2], 4
      %s17 = int_to_ptr.vmem [resolvable:$true] %s16
      %22 = dma.hbm_to_vmem [thread:$0]  %s0, 256, %s17, [#allocation3], 128, 128, 8
    $region5: #{tpu_custom_call.1} parent=1 // pred_fallthru
      _
    // Predicated region
    $region6: #{tpu_custom_call.1} parent=1 // pred_check
      _
    $region7: #{tpu_custom_call.1} parent=1 // pred_check_branch
      %24 = sbr.rel (0) target = $region9
    $region8: #{tpu_custom_call.1} parent=1 // pred_region
      %s26 = ssub.s32 12288, 12288
      %27 = vsyncadd [#allocation6], %s26
      %s28 = sshll.u32 [#allocation5], 4
      %s29 = int_to_ptr.vmem [resolvable:$true] %s28
      %34 = dma.hbm_to_vmem [thread:$0]  %s1, 12288, %s29, [#allocation6], 768, 768, 48
    $region9: #{tpu_custom_call.1} parent=1 // pred_fallthru
      _
    // Predicated region
    $region10: #{tpu_custom_call.1} parent=1 // pred_check
      _
    $region11: #{tpu_custom_call.1} parent=1 // pred_check_branch
      %36 = sbr.rel (0) target = $region13
    $region12: #{tpu_custom_call.1} parent=1 // pred_region
      %s38 = ssub.s32 6144, 6144
      %39 = vsyncadd [#allocation6], %s38
      %s40 = sshll.u32 [#allocation7], 4
      %s41 = int_to_ptr.vmem [resolvable:$true] %s40
      %46 = dma.hbm_to_vmem [thread:$0]  %s2, 6144, %s41, [#allocation6], 128, 128, 8
    $region13: #{tpu_custom_call.1} parent=1 // pred_fallthru
      _
    // Predicated region
    $region14: #{tpu_custom_call.1} parent=1 // pred_check
      _
    $region15: #{tpu_custom_call.1} parent=1 // pred_check_branch
      %48 = sbr.rel (0) target = $region17
    $region16: #{tpu_custom_call.1} parent=1 // pred_region
      %49 = dma.done [#allocation3], 256
    $region17: #{tpu_custom_call.1} parent=1 // pred_fallthru
      _
    // Predicated region
    $region18: #{tpu_custom_call.1} parent=1 // pred_check
      _
    $region19: #{tpu_custom_call.1} parent=1 // pred_check_branch
      %51 = sbr.rel (0) target = $region21
    $region20: #{tpu_custom_call.1} parent=1 // pred_region
      %52 = dma.done [#allocation6], 12288
    $region21: #{tpu_custom_call.1} parent=1 // pred_fallthru
      _
    // Predicated region
    $region22: #{tpu_custom_call.1} parent=1 // pred_check
      _
    $region23: #{tpu_custom_call.1} parent=1 // pred_check_branch
      %54 = sbr.rel (0) target = $region25
    $region24: #{tpu_custom_call.1} parent=1 // pred_region
      %55 = dma.done [#allocation6], 6144
    $region25: #{tpu_custom_call.1} parent=1 // pred_fallthru
      _
    %v56 = vld [vmem:[#allocation2] sm:$0xff]
    %v57 = vld [vmem:[#allocation2 + $0x8] sm:$0xff]
    %v58 = vld [vmem:[#allocation5] sm:$0xff]
    %v59 = vld [vmem:[#allocation5 + $0x8] sm:$0xff]
    %v60 = vld [vmem:[#allocation5 + $0x10] sm:$0xff]
    %v61 = vld [vmem:[#allocation5 + $0x18] sm:$0xff]
    %v62 = vld [vmem:[#allocation5 + $0x20] sm:$0xff]
    %v63 = vld [vmem:[#allocation5 + $0x28] sm:$0xff]
    %v64 = vld [vmem:[#allocation5 + $0x30] sm:$0xff]
    %v65 = vld [vmem:[#allocation5 + $0x38] sm:$0xff]
    %v66 = vld [vmem:[#allocation5 + $0x40] sm:$0xff]
    %v67 = vld [vmem:[#allocation5 + $0x48] sm:$0xff]
    %v68 = vld [vmem:[#allocation5 + $0x50] sm:$0xff]
    %v69 = vld [vmem:[#allocation5 + $0x58] sm:$0xff]
    %v70 = vld [vmem:[#allocation5 + $0x60] sm:$0xff]
    %v71 = vld [vmem:[#allocation5 + $0x68] sm:$0xff]
    %v72 = vld [vmem:[#allocation5 + $0x70] sm:$0xff]
    %v73 = vld [vmem:[#allocation5 + $0x78] sm:$0xff]
    %v74 = vld [vmem:[#allocation5 + $0x80] sm:$0xff]
    %v75 = vld [vmem:[#allocation5 + $0x88] sm:$0xff]
    %v76 = vld [vmem:[#allocation5 + $0x90] sm:$0xff]
    %v77 = vld [vmem:[#allocation5 + $0x98] sm:$0xff]
    %v78 = vld [vmem:[#allocation5 + $0xa0] sm:$0xff]
    %v79 = vld [vmem:[#allocation5 + $0xa8] sm:$0xff]
    %v80 = vld [vmem:[#allocation5 + $0xb0] sm:$0xff]
    %v81 = vld [vmem:[#allocation5 + $0xb8] sm:$0xff]
    %v82 = vld [vmem:[#allocation5 + $0xc0] sm:$0xff]
    %v83 = vld [vmem:[#allocation5 + $0xc8] sm:$0xff]
    %v84 = vld [vmem:[#allocation5 + $0xd0] sm:$0xff]
    %v85 = vld [vmem:[#allocation5 + $0xd8] sm:$0xff]
    %v86 = vld [vmem:[#allocation5 + $0xe0] sm:$0xff]
    %v87 = vld [vmem:[#allocation5 + $0xe8] sm:$0xff]
    %v88 = vld [vmem:[#allocation5 + $0xf0] sm:$0xff]
    %v89 = vld [vmem:[#allocation5 + $0xf8] sm:$0xff]
    %v90 = vld [vmem:[#allocation5 + $0x100] sm:$0xff]
    %v91 = vld [vmem:[#allocation5 + $0x108] sm:$0xff]
    %v92 = vld [vmem:[#allocation5 + $0x110] sm:$0xff]
    %v93 = vld [vmem:[#allocation5 + $0x118] sm:$0xff]
    %v94 = vld [vmem:[#allocation5 + $0x120] sm:$0xff]
    %v95 = vld [vmem:[#allocation5 + $0x128] sm:$0xff]
    %v96 = vld [vmem:[#allocation5 + $0x130] sm:$0xff]
    %v97 = vld [vmem:[#allocation5 + $0x138] sm:$0xff]
    %v98 = vld [vmem:[#allocation5 + $0x140] sm:$0xff]
    %v99 = vld [vmem:[#allocation5 + $0x148] sm:$0xff]
    %v100 = vld [vmem:[#allocation5 + $0x150] sm:$0xff]
    %v101 = vld [vmem:[#allocation5 + $0x158] sm:$0xff]
    %v102 = vld [vmem:[#allocation5 + $0x160] sm:$0xff]
    %v103 = vld [vmem:[#allocation5 + $0x168] sm:$0xff]
    %v104 = vld [vmem:[#allocation5 + $0x170] sm:$0xff]
    %v105 = vld [vmem:[#allocation5 + $0x178] sm:$0xff]
    %v106 = vld [vmem:[#allocation5 + $0x180] sm:$0xff]
    %v107 = vld [vmem:[#allocation5 + $0x188] sm:$0xff]
    %v108 = vld [vmem:[#allocation5 + $0x190] sm:$0xff]
    %v109 = vld [vmem:[#allocation5 + $0x198] sm:$0xff]
    %v110 = vld [vmem:[#allocation5 + $0x1a0] sm:$0xff]
    %v111 = vld [vmem:[#allocation5 + $0x1a8] sm:$0xff]
    %v112 = vld [vmem:[#allocation5 + $0x1b0] sm:$0xff]
    %v113 = vld [vmem:[#allocation5 + $0x1b8] sm:$0xff]
    %v114 = vld [vmem:[#allocation5 + $0x1c0] sm:$0xff]
    %v115 = vld [vmem:[#allocation5 + $0x1c8] sm:$0xff]
    %v116 = vld [vmem:[#allocation5 + $0x1d0] sm:$0xff]
    %v117 = vld [vmem:[#allocation5 + $0x1d8] sm:$0xff]
    %v118 = vld [vmem:[#allocation5 + $0x1e0] sm:$0xff]
    %v119 = vld [vmem:[#allocation5 + $0x1e8] sm:$0xff]
    %v120 = vld [vmem:[#allocation5 + $0x1f0] sm:$0xff]
    %v121 = vld [vmem:[#allocation5 + $0x1f8] sm:$0xff]
    %v122 = vld [vmem:[#allocation5 + $0x200] sm:$0xff]
    %v123 = vld [vmem:[#allocation5 + $0x208] sm:$0xff]
    %v124 = vld [vmem:[#allocation5 + $0x210] sm:$0xff]
    %v125 = vld [vmem:[#allocation5 + $0x218] sm:$0xff]
    %v126 = vld [vmem:[#allocation5 + $0x220] sm:$0xff]
    %v127 = vld [vmem:[#allocation5 + $0x228] sm:$0xff]
    %v128 = vld [vmem:[#allocation5 + $0x230] sm:$0xff]
    %v129 = vld [vmem:[#allocation5 + $0x238] sm:$0xff]
    %v130 = vld [vmem:[#allocation5 + $0x240] sm:$0xff]
    %v131 = vld [vmem:[#allocation5 + $0x248] sm:$0xff]
    %v132 = vld [vmem:[#allocation5 + $0x250] sm:$0xff]
    %v133 = vld [vmem:[#allocation5 + $0x258] sm:$0xff]
    %v134 = vld [vmem:[#allocation5 + $0x260] sm:$0xff]
    %v135 = vld [vmem:[#allocation5 + $0x268] sm:$0xff]
    %v136 = vld [vmem:[#allocation5 + $0x270] sm:$0xff]
    %v137 = vld [vmem:[#allocation5 + $0x278] sm:$0xff]
    %v138 = vld [vmem:[#allocation5 + $0x280] sm:$0xff]
    %v139 = vld [vmem:[#allocation5 + $0x288] sm:$0xff]
    %v140 = vld [vmem:[#allocation5 + $0x290] sm:$0xff]
    %v141 = vld [vmem:[#allocation5 + $0x298] sm:$0xff]
    %v142 = vld [vmem:[#allocation5 + $0x2a0] sm:$0xff]
    %v143 = vld [vmem:[#allocation5 + $0x2a8] sm:$0xff]
    %v144 = vld [vmem:[#allocation5 + $0x2b0] sm:$0xff]
    %v145 = vld [vmem:[#allocation5 + $0x2b8] sm:$0xff]
    %v146 = vld [vmem:[#allocation5 + $0x2c0] sm:$0xff]
    %v147 = vld [vmem:[#allocation5 + $0x2c8] sm:$0xff]
    %v148 = vld [vmem:[#allocation5 + $0x2d0] sm:$0xff]
    %v149 = vld [vmem:[#allocation5 + $0x2d8] sm:$0xff]
    %v150 = vld [vmem:[#allocation5 + $0x2e0] sm:$0xff]
    %v151 = vld [vmem:[#allocation5 + $0x2e8] sm:$0xff]
    %v152 = vld [vmem:[#allocation5 + $0x2f0] sm:$0xff]
    %v153 = vld [vmem:[#allocation5 + $0x2f8] sm:$0xff]
    %154 = vmatprep.subr.mxu0 %v149
    %155 = vmatpush1.msra.mxu0 %v148
    %156 = vmatprep.subr.mxu0 %v143
    %157 = vmatpush1.msra.mxu0 %v142
    %158 = vmatprep.subr.mxu0 %v137
    %159 = vmatpush1.msra.mxu0 %v136
    %160 = vmatprep.subr.mxu0 %v131
    %161 = vmatpush1.msra.mxu0 %v130
    %162 = vmatprep.subr.mxu0 %v125
    %163 = vmatpush1.msra.mxu0 %v124
    %164 = vmatprep.subr.mxu0 %v119
    %165 = vmatpush1.msra.mxu0 %v118
    %166 = vmatprep.subr.mxu0 %v113
    %167 = vmatpush1.msra.mxu0 %v112
    %168 = vmatprep.subr.mxu0 %v107
    %169 = vmatpush1.msra.mxu0 %v106
    %170 = vmatprep.subr.mxu0 %v101
    %171 = vmatpush1.msra.mxu0 %v100
    %172 = vmatprep.subr.mxu0 %v95
    %173 = vmatpush1.msra.mxu0 %v94
    %174 = vmatprep.subr.mxu0 %v89
    %175 = vmatpush1.msra.mxu0 %v88
    %176 = vmatprep.subr.mxu0 %v83
    %177 = vmatpush1.msra.mxu0 %v82
    %178 = vmatprep.subr.mxu0 %v77
    %179 = vmatpush1.msra.mxu0 %v76
    %180 = vmatprep.subr.mxu0 %v71
    %181 = vmatpush1.msra.mxu0 %v70
    %182 = vmatprep.subr.mxu0 %v65
    %183 = vmatpush1.msra.mxu0 %v64
    %184 = vmatprep.subr.mxu0 %v59
    %185 = vmatpush1.msra.mxu0 %v58
    %186 = vmatprep.subr.mxu0 0.0
    %187 = vmatpush2.msra.mxu0 0.0
    %188 = vmatprep.subr.mxu0 0.0
    %189 = vmatpush2.msra.mxu0 0.0
    %190 = vmatprep.subr.mxu0 0.0
    %191 = vmatpush2.msra.mxu0 0.0
    %192 = vmatprep.subr.mxu0 0.0
    %193 = vmatpush2.msra.mxu0 0.0
    %194 = vmatprep.subr.mxu0 0.0
    %195 = vmatpush2.msra.mxu0 0.0
    %196 = vmatprep.subr.mxu0 0.0
    %197 = vmatpush2.msra.mxu0 0.0
    %198 = vmatprep.subr.mxu0 0.0
    %199 = vmatpush2.msra.mxu0 0.0
    %200 = vmatprep.subr.mxu0 0.0
    %201 = vmatpush2.msra.mxu0 0.0
    %202 = vmatprep.subr.mxu0 0.0
    %203 = vmatpush2.msra.mxu0 0.0
    %204 = vmatprep.subr.mxu0 0.0
    %205 = vmatpush2.msra.mxu0 0.0
    %206 = vmatprep.subr.mxu0 0.0
    %207 = vmatpush2.msra.mxu0 0.0
    %208 = vmatprep.subr.mxu0 0.0
    %209 = vmatpush2.msra.mxu0 0.0
    %210 = vmatprep.subr.mxu0 0.0
    %211 = vmatpush2.msra.mxu0 0.0
    %212 = vmatprep.subr.mxu0 0.0
    %213 = vmatpush2.msra.mxu0 0.0
    %214 = vmatprep.subr.mxu0 0.0
    %215 = vmatpush2.msra.mxu0 0.0
    %216 = vmatprep.subr.mxu0 0.0
    %217 = vmatpush2.msra.mxu0 0.0
    %218 = vmatprep.mubr.f32.mxu0 0.0
    %219 = vmatmul.mubr.f32.gmra.mxu0 %v56
    %v220 = vpop.f32.mrf.mxu0
    %v221 = vadd.f32 0.0, %v220
    %v222 = vpop.f32.mrf.mxu0
    %v223 = vadd.f32 0.0, %v222
    %224 = vmatprep.mubr.f32.mxu0 0.0
    %225 = vmatmul.mubr.f32.gmra.mxu0 %v57
    %v226 = vpop.f32.mrf.mxu0
    %v227 = vadd.f32 0.0, %v226
    %v228 = vpop.f32.mrf.mxu0
    %v229 = vadd.f32 0.0, %v228
    %230 = vdwg.mxu0
    %231 = vmatprep.subr.mxu0 %v151
    %232 = vmatpush1.msra.mxu0 %v150
    %233 = vmatprep.subr.mxu0 %v145
    %234 = vmatpush1.msra.mxu0 %v144
    %235 = vmatprep.subr.mxu0 %v139
    %236 = vmatpush1.msra.mxu0 %v138
    %237 = vmatprep.subr.mxu0 %v133
    %238 = vmatpush1.msra.mxu0 %v132
    %239 = vmatprep.subr.mxu0 %v127
    %240 = vmatpush1.msra.mxu0 %v126
    %241 = vmatprep.subr.mxu0 %v121
    %242 = vmatpush1.msra.mxu0 %v120
    %243 = vmatprep.subr.mxu0 %v115
    %244 = vmatpush1.msra.mxu0 %v114
    %245 = vmatprep.subr.mxu0 %v109
    %246 = vmatpush1.msra.mxu0 %v108
    %247 = vmatprep.subr.mxu0 %v103
    %248 = vmatpush1.msra.mxu0 %v102
    %249 = vmatprep.subr.mxu0 %v97
    %250 = vmatpush1.msra.mxu0 %v96
    %251 = vmatprep.subr.mxu0 %v91
    %252 = vmatpush1.msra.mxu0 %v90
    %253 = vmatprep.subr.mxu0 %v85
    %254 = vmatpush1.msra.mxu0 %v84
    %255 = vmatprep.subr.mxu0 %v79
    %256 = vmatpush1.msra.mxu0 %v78
    %257 = vmatprep.subr.mxu0 %v73
    %258 = vmatpush1.msra.mxu0 %v72
    %259 = vmatprep.subr.mxu0 %v67
    %260 = vmatpush1.msra.mxu0 %v66
    %261 = vmatprep.subr.mxu0 %v61
    %262 = vmatpush1.msra.mxu0 %v60
    %263 = vmatprep.subr.mxu0 0.0
    %264 = vmatpush2.msra.mxu0 0.0
    %265 = vmatprep.subr.mxu0 0.0
    %266 = vmatpush2.msra.mxu0 0.0
    %267 = vmatprep.subr.mxu0 0.0
    %268 = vmatpush2.msra.mxu0 0.0
    %269 = vmatprep.subr.mxu0 0.0
    %270 = vmatpush2.msra.mxu0 0.0
    %271 = vmatprep.subr.mxu0 0.0
    %272 = vmatpush2.msra.mxu0 0.0
    %273 = vmatprep.subr.mxu0 0.0
    %274 = vmatpush2.msra.mxu0 0.0
    %275 = vmatprep.subr.mxu0 0.0
    %276 = vmatpush2.msra.mxu0 0.0
    %277 = vmatprep.subr.mxu0 0.0
    %278 = vmatpush2.msra.mxu0 0.0
    %279 = vmatprep.subr.mxu0 0.0
    %280 = vmatpush2.msra.mxu0 0.0
    %281 = vmatprep.subr.mxu0 0.0
    %282 = vmatpush2.msra.mxu0 0.0
    %283 = vmatprep.subr.mxu0 0.0
    %284 = vmatpush2.msra.mxu0 0.0
    %285 = vmatprep.subr.mxu0 0.0
    %286 = vmatpush2.msra.mxu0 0.0
    %287 = vmatprep.subr.mxu0 0.0
    %288 = vmatpush2.msra.mxu0 0.0
    %289 = vmatprep.subr.mxu0 0.0
    %290 = vmatpush2.msra.mxu0 0.0
    %291 = vmatprep.subr.mxu0 0.0
    %292 = vmatpush2.msra.mxu0 0.0
    %293 = vmatprep.subr.mxu0 0.0
    %294 = vmatpush2.msra.mxu0 0.0
    %295 = vmatprep.mubr.f32.mxu0 0.0
    %296 = vmatmul.mubr.f32.gmra.mxu0 %v56
    %v297 = vpop.f32.mrf.mxu0
    %v298 = vadd.f32 0.0, %v297
    %v299 = vpop.f32.mrf.mxu0
    %v300 = vadd.f32 0.0, %v299
    %301 = vmatprep.mubr.f32.mxu0 0.0
    %302 = vmatmul.mubr.f32.gmra.mxu0 %v57
    %v303 = vpop.f32.mrf.mxu0
    %v304 = vadd.f32 0.0, %v303
    %v305 = vpop.f32.mrf.mxu0
    %v306 = vadd.f32 0.0, %v305
    %307 = vdwg.mxu0
    %308 = vmatprep.subr.mxu0 %v153
    %309 = vmatpush1.msra.mxu0 %v152
    %310 = vmatprep.subr.mxu0 %v147
    %311 = vmatpush1.msra.mxu0 %v146
    %312 = vmatprep.subr.mxu0 %v141
    %313 = vmatpush1.msra.mxu0 %v140
    %314 = vmatprep.subr.mxu0 %v135
    %315 = vmatpush1.msra.mxu0 %v134
    %316 = vmatprep.subr.mxu0 %v129
    %317 = vmatpush1.msra.mxu0 %v128
    %318 = vmatprep.subr.mxu0 %v123
    %319 = vmatpush1.msra.mxu0 %v122
    %320 = vmatprep.subr.mxu0 %v117
    %321 = vmatpush1.msra.mxu0 %v116
    %322 = vmatprep.subr.mxu0 %v111
    %323 = vmatpush1.msra.mxu0 %v110
    %324 = vmatprep.subr.mxu0 %v105
    %325 = vmatpush1.msra.mxu0 %v104
    %326 = vmatprep.subr.mxu0 %v99
    %327 = vmatpush1.msra.mxu0 %v98
    %328 = vmatprep.subr.mxu0 %v93
    %329 = vmatpush1.msra.mxu0 %v92
    %330 = vmatprep.subr.mxu0 %v87
    %331 = vmatpush1.msra.mxu0 %v86
    %332 = vmatprep.subr.mxu0 %v81
    %333 = vmatpush1.msra.mxu0 %v80
    %334 = vmatprep.subr.mxu0 %v75
    %335 = vmatpush1.msra.mxu0 %v74
    %336 = vmatprep.subr.mxu0 %v69
    %337 = vmatpush1.msra.mxu0 %v68
    %338 = vmatprep.subr.mxu0 %v63
    %339 = vmatpush1.msra.mxu0 %v62
    %340 = vmatprep.subr.mxu0 0.0
    %341 = vmatpush2.msra.mxu0 0.0
    %342 = vmatprep.subr.mxu0 0.0
    %343 = vmatpush2.msra.mxu0 0.0
    %344 = vmatprep.subr.mxu0 0.0
    %345 = vmatpush2.msra.mxu0 0.0
    %346 = vmatprep.subr.mxu0 0.0
    %347 = vmatpush2.msra.mxu0 0.0
    %348 = vmatprep.subr.mxu0 0.0
    %349 = vmatpush2.msra.mxu0 0.0
    %350 = vmatprep.subr.mxu0 0.0
    %351 = vmatpush2.msra.mxu0 0.0
    %352 = vmatprep.subr.mxu0 0.0
    %353 = vmatpush2.msra.mxu0 0.0
    %354 = vmatprep.subr.mxu0 0.0
    %355 = vmatpush2.msra.mxu0 0.0
    %356 = vmatprep.subr.mxu0 0.0
    %357 = vmatpush2.msra.mxu0 0.0
    %358 = vmatprep.subr.mxu0 0.0
    %359 = vmatpush2.msra.mxu0 0.0
    %360 = vmatprep.subr.mxu0 0.0
    %361 = vmatpush2.msra.mxu0 0.0
    %362 = vmatprep.subr.mxu0 0.0
    %363 = vmatpush2.msra.mxu0 0.0
    %364 = vmatprep.subr.mxu0 0.0
    %365 = vmatpush2.msra.mxu0 0.0
    %366 = vmatprep.subr.mxu0 0.0
    %367 = vmatpush2.msra.mxu0 0.0
    %368 = vmatprep.subr.mxu0 0.0
    %369 = vmatpush2.msra.mxu0 0.0
    %370 = vmatprep.subr.mxu0 0.0
    %371 = vmatpush2.msra.mxu0 0.0
    %372 = vmatprep.mubr.f32.mxu0 0.0
    %373 = vmatmul.mubr.f32.gmra.mxu0 %v56
    %v374 = vpop.f32.mrf.mxu0
    %v375 = vadd.f32 0.0, %v374
    %v376 = vpop.f32.mrf.mxu0
    %v377 = vadd.f32 0.0, %v376
    %378 = vmatprep.mubr.f32.mxu0 0.0
    %379 = vmatmul.mubr.f32.gmra.mxu0 %v57
    %v380 = vpop.f32.mrf.mxu0
    %v381 = vadd.f32 0.0, %v380
    %v382 = vpop.f32.mrf.mxu0
    %v383 = vadd.f32 0.0, %v382
    %384 = vdwg.mxu0
    %v385 = vxor.u32 %v221, 2147483648
    %v386 = vxor.u32 %v223, 2147483648
    %v387 = vxor.u32 %v298, 2147483648
    %v388 = vxor.u32 %v227, 2147483648
    %v389 = vxor.u32 %v229, 2147483648
    %v390 = vxor.u32 %v304, 2147483648
    %v391 = vmul.f32 %v385, 1.442695
    %v392 = vpow.pop %v391
    %v393 = vmul.f32 %v386, 1.442695
    %v394 = vpow.pop %v393
    %v395 = vmul.f32 %v387, 1.442695
    %v396 = vpow.pop %v395
    %v397 = vmul.f32 %v388, 1.442695
    %v398 = vpow.pop %v397
    %v399 = vmul.f32 %v389, 1.442695
    %v400 = vpow.pop %v399
    %v401 = vmul.f32 %v390, 1.442695
    %v402 = vpow.pop %v401
    %v403 = vadd.f32 %v392, 1.0
    %v404 = vadd.f32 %v394, 1.0
    %v405 = vadd.f32 %v396, 1.0
    %v406 = vadd.f32 %v398, 1.0
    %v407 = vadd.f32 %v400, 1.0
    %v408 = vadd.f32 %v402, 1.0
    %v409 = vrcp.pop %v403
    %v410 = vmul.f32 1.0, %v409
    %v411 = vrcp.pop %v404
    %v412 = vmul.f32 1.0, %v411
    %v413 = vrcp.pop %v405
    %v414 = vmul.f32 1.0, %v413
    %v415 = vrcp.pop %v406
    %v416 = vmul.f32 1.0, %v415
    %v417 = vrcp.pop %v407
    %v418 = vmul.f32 1.0, %v417
    %v419 = vrcp.pop %v408
    %v420 = vmul.f32 1.0, %v419
    %v421 = vmul.f32 %v221, %v410
    %v422 = vmul.f32 %v223, %v412
    %v423 = vmul.f32 %v298, %v414
    %v424 = vmul.f32 %v227, %v416
    %v425 = vmul.f32 %v229, %v418
    %v426 = vmul.f32 %v304, %v420
    %v427 = vmul.f32 %v421, %v300
    %v428 = vmul.f32 %v422, %v375
    %v429 = vmul.f32 %v423, %v377
    %v430 = vmul.f32 %v424, %v306
    %v431 = vmul.f32 %v425, %v381
    %v432 = vmul.f32 %v426, %v383
    %v433 = vld [vmem:[#allocation7] sm:$0xff]
    %v434 = vld [vmem:[#allocation7 + $0x8] sm:$0xff]
    %v435 = vld [vmem:[#allocation7 + $0x10] sm:$0xff]
    %v436 = vld [vmem:[#allocation7 + $0x18] sm:$0xff]
    %v437 = vld [vmem:[#allocation7 + $0x20] sm:$0xff]
    %v438 = vld [vmem:[#allocation7 + $0x28] sm:$0xff]
    %v439 = vld [vmem:[#allocation7 + $0x30] sm:$0xff]
    %v440 = vld [vmem:[#allocation7 + $0x38] sm:$0xff]
    %v441 = vld [vmem:[#allocation7 + $0x40] sm:$0xff]
    %v442 = vld [vmem:[#allocation7 + $0x48] sm:$0xff]
    %v443 = vld [vmem:[#allocation7 + $0x50] sm:$0xff]
    %v444 = vld [vmem:[#allocation7 + $0x58] sm:$0xff]
    %v445 = vld [vmem:[#allocation7 + $0x60] sm:$0xff]
    %v446 = vld [vmem:[#allocation7 + $0x68] sm:$0xff]
    %v447 = vld [vmem:[#allocation7 + $0x70] sm:$0xff]
    %v448 = vld [vmem:[#allocation7 + $0x78] sm:$0xff]
    %v449 = vld [vmem:[#allocation7 + $0x80] sm:$0xff]
    %v450 = vld [vmem:[#allocation7 + $0x88] sm:$0xff]
    %v451 = vld [vmem:[#allocation7 + $0x90] sm:$0xff]
    %v452 = vld [vmem:[#allocation7 + $0x98] sm:$0xff]
    %v453 = vld [vmem:[#allocation7 + $0xa0] sm:$0xff]
    %v454 = vld [vmem:[#allocation7 + $0xa8] sm:$0xff]
    %v455 = vld [vmem:[#allocation7 + $0xb0] sm:$0xff]
    %v456 = vld [vmem:[#allocation7 + $0xb8] sm:$0xff]
    %v457 = vld [vmem:[#allocation7 + $0xc0] sm:$0xff]
    %v458 = vld [vmem:[#allocation7 + $0xc8] sm:$0xff]
    %v459 = vld [vmem:[#allocation7 + $0xd0] sm:$0xff]
    %v460 = vld [vmem:[#allocation7 + $0xd8] sm:$0xff]
    %v461 = vld [vmem:[#allocation7 + $0xe0] sm:$0xff]
    %v462 = vld [vmem:[#allocation7 + $0xe8] sm:$0xff]
    %v463 = vld [vmem:[#allocation7 + $0xf0] sm:$0xff]
    %v464 = vld [vmem:[#allocation7 + $0xf8] sm:$0xff]
    %v465 = vld [vmem:[#allocation7 + $0x100] sm:$0xff]
    %v466 = vld [vmem:[#allocation7 + $0x108] sm:$0xff]
    %v467 = vld [vmem:[#allocation7 + $0x110] sm:$0xff]
    %v468 = vld [vmem:[#allocation7 + $0x118] sm:$0xff]
    %v469 = vld [vmem:[#allocation7 + $0x120] sm:$0xff]
    %v470 = vld [vmem:[#allocation7 + $0x128] sm:$0xff]
    %v471 = vld [vmem:[#allocation7 + $0x130] sm:$0xff]
    %v472 = vld [vmem:[#allocation7 + $0x138] sm:$0xff]
    %v473 = vld [vmem:[#allocation7 + $0x140] sm:$0xff]
    %v474 = vld [vmem:[#allocation7 + $0x148] sm:$0xff]
    %v475 = vld [vmem:[#allocation7 + $0x150] sm:$0xff]
    %v476 = vld [vmem:[#allocation7 + $0x158] sm:$0xff]
    %v477 = vld [vmem:[#allocation7 + $0x160] sm:$0xff]
    %v478 = vld [vmem:[#allocation7 + $0x168] sm:$0xff]
    %v479 = vld [vmem:[#allocation7 + $0x170] sm:$0xff]
    %v480 = vld [vmem:[#allocation7 + $0x178] sm:$0xff]
    %481 = vmatprep.subr.mxu0 0.0
    %482 = vmatpush1.msra.mxu0 %v448
    %483 = vmatprep.subr.mxu0 0.0
    %484 = vmatpush1.msra.mxu0 %v447
    %485 = vmatprep.subr.mxu0 0.0
    %486 = vmatpush1.msra.mxu0 %v446
    %487 = vmatprep.subr.mxu0 0.0
    %488 = vmatpush1.msra.mxu0 %v445
    %489 = vmatprep.subr.mxu0 0.0
    %490 = vmatpush1.msra.mxu0 %v444
    %491 = vmatprep.subr.mxu0 0.0
    %492 = vmatpush1.msra.mxu0 %v443
    %493 = vmatprep.subr.mxu0 0.0
    %494 = vmatpush1.msra.mxu0 %v442
    %495 = vmatprep.subr.mxu0 0.0
    %496 = vmatpush1.msra.mxu0 %v441
    %497 = vmatprep.subr.mxu0 0.0
    %498 = vmatpush1.msra.mxu0 %v440
    %499 = vmatprep.subr.mxu0 0.0
    %500 = vmatpush1.msra.mxu0 %v439
    %501 = vmatprep.subr.mxu0 0.0
    %502 = vmatpush1.msra.mxu0 %v438
    %503 = vmatprep.subr.mxu0 0.0
    %504 = vmatpush1.msra.mxu0 %v437
    %505 = vmatprep.subr.mxu0 0.0
    %506 = vmatpush1.msra.mxu0 %v436
    %507 = vmatprep.subr.mxu0 0.0
    %508 = vmatpush1.msra.mxu0 %v435
    %509 = vmatprep.subr.mxu0 0.0
    %510 = vmatpush1.msra.mxu0 %v434
    %511 = vmatprep.subr.mxu0 0.0
    %512 = vmatpush1.msra.mxu0 %v433
    %513 = vmatprep.subr.mxu0 0.0
    %514 = vmatpush2.msra.mxu0 %v464
    %515 = vmatprep.subr.mxu0 0.0
    %516 = vmatpush2.msra.mxu0 %v463
    %517 = vmatprep.subr.mxu0 0.0
    %518 = vmatpush2.msra.mxu0 %v462
    %519 = vmatprep.subr.mxu0 0.0
    %520 = vmatpush2.msra.mxu0 %v461
    %521 = vmatprep.subr.mxu0 0.0
    %522 = vmatpush2.msra.mxu0 %v460
    %523 = vmatprep.subr.mxu0 0.0
    %524 = vmatpush2.msra.mxu0 %v459
    %525 = vmatprep.subr.mxu0 0.0
    %526 = vmatpush2.msra.mxu0 %v458
    %527 = vmatprep.subr.mxu0 0.0
    %528 = vmatpush2.msra.mxu0 %v457
    %529 = vmatprep.subr.mxu0 0.0
    %530 = vmatpush2.msra.mxu0 %v456
    %531 = vmatprep.subr.mxu0 0.0
    %532 = vmatpush2.msra.mxu0 %v455
    %533 = vmatprep.subr.mxu0 0.0
    %534 = vmatpush2.msra.mxu0 %v454
    %535 = vmatprep.subr.mxu0 0.0
    %536 = vmatpush2.msra.mxu0 %v453
    %537 = vmatprep.subr.mxu0 0.0
    %538 = vmatpush2.msra.mxu0 %v452
    %539 = vmatprep.subr.mxu0 0.0
    %540 = vmatpush2.msra.mxu0 %v451
    %541 = vmatprep.subr.mxu0 0.0
    %542 = vmatpush2.msra.mxu0 %v450
    %543 = vmatprep.subr.mxu0 0.0
    %544 = vmatpush2.msra.mxu0 %v449
    %545 = vmatprep.mubr.f32.mxu0 %v428
    %546 = vmatmul.mubr.f32.gmra.mxu0 %v427
    %v547 = vpop.f32.mrf.mxu0
    %v548 = vadd.f32 0.0, %v547
    %v549 = vpop.f32.mrf.mxu0
    %550 = vmatprep.mubr.f32.mxu0 %v431
    %551 = vmatmul.mubr.f32.gmra.mxu0 %v430
    %v552 = vpop.f32.mrf.mxu0
    %v553 = vadd.f32 0.0, %v552
    %v554 = vpop.f32.mrf.mxu0
    %555 = vdwg.mxu0
    %556 = vmatprep.subr.mxu0 0.0
    %557 = vmatpush1.msra.mxu0 %v480
    %558 = vmatprep.subr.mxu0 0.0
    %559 = vmatpush1.msra.mxu0 %v479
    %560 = vmatprep.subr.mxu0 0.0
    %561 = vmatpush1.msra.mxu0 %v478
    %562 = vmatprep.subr.mxu0 0.0
    %563 = vmatpush1.msra.mxu0 %v477
    %564 = vmatprep.subr.mxu0 0.0
    %565 = vmatpush1.msra.mxu0 %v476
    %566 = vmatprep.subr.mxu0 0.0
    %567 = vmatpush1.msra.mxu0 %v475
    %568 = vmatprep.subr.mxu0 0.0
    %569 = vmatpush1.msra.mxu0 %v474
    %570 = vmatprep.subr.mxu0 0.0
    %571 = vmatpush1.msra.mxu0 %v473
    %572 = vmatprep.subr.mxu0 0.0
    %573 = vmatpush1.msra.mxu0 %v472
    %574 = vmatprep.subr.mxu0 0.0
    %575 = vmatpush1.msra.mxu0 %v471
    %576 = vmatprep.subr.mxu0 0.0
    %577 = vmatpush1.msra.mxu0 %v470
    %578 = vmatprep.subr.mxu0 0.0
    %579 = vmatpush1.msra.mxu0 %v469
    %580 = vmatprep.subr.mxu0 0.0
    %581 = vmatpush1.msra.mxu0 %v468
    %582 = vmatprep.subr.mxu0 0.0
    %583 = vmatpush1.msra.mxu0 %v467
    %584 = vmatprep.subr.mxu0 0.0
    %585 = vmatpush1.msra.mxu0 %v466
    %586 = vmatprep.subr.mxu0 0.0
    %587 = vmatpush1.msra.mxu0 %v465
    %588 = vmatprep.subr.mxu0 0.0
    %589 = vmatpush2.msra.mxu0 0.0
    %590 = vmatprep.subr.mxu0 0.0
    %591 = vmatpush2.msra.mxu0 0.0
    %592 = vmatprep.subr.mxu0 0.0
    %593 = vmatpush2.msra.mxu0 0.0
    %594 = vmatprep.subr.mxu0 0.0
    %595 = vmatpush2.msra.mxu0 0.0
    %596 = vmatprep.subr.mxu0 0.0
    %597 = vmatpush2.msra.mxu0 0.0
    %598 = vmatprep.subr.mxu0 0.0
    %599 = vmatpush2.msra.mxu0 0.0
    %600 = vmatprep.subr.mxu0 0.0
    %601 = vmatpush2.msra.mxu0 0.0
    %602 = vmatprep.subr.mxu0 0.0
    %603 = vmatpush2.msra.mxu0 0.0
    %604 = vmatprep.subr.mxu0 0.0
    %605 = vmatpush2.msra.mxu0 0.0
    %606 = vmatprep.subr.mxu0 0.0
    %607 = vmatpush2.msra.mxu0 0.0
    %608 = vmatprep.subr.mxu0 0.0
    %609 = vmatpush2.msra.mxu0 0.0
    %610 = vmatprep.subr.mxu0 0.0
    %611 = vmatpush2.msra.mxu0 0.0
    %612 = vmatprep.subr.mxu0 0.0
    %613 = vmatpush2.msra.mxu0 0.0
    %614 = vmatprep.subr.mxu0 0.0
    %615 = vmatpush2.msra.mxu0 0.0
    %616 = vmatprep.subr.mxu0 0.0
    %617 = vmatpush2.msra.mxu0 0.0
    %618 = vmatprep.subr.mxu0 0.0
    %619 = vmatpush2.msra.mxu0 0.0
    %620 = vmatprep.mubr.f32.mxu0 0.0
    %621 = vmatmul.mubr.f32.gmra.mxu0 %v429
    %v622 = vpop.f32.mrf.mxu0
    %v623 = vadd.f32 %v548, %v622
    %v624 = vpop.f32.mrf.mxu0
    %625 = vmatprep.mubr.f32.mxu0 0.0
    %626 = vmatmul.mubr.f32.gmra.mxu0 %v432
    %v627 = vpop.f32.mrf.mxu0
    %v628 = vadd.f32 %v553, %v627
    %v629 = vpop.f32.mrf.mxu0
    %630 = vdwg.mxu0
    %p631 = scmp.eq.s32.totalorder 0, 0
    // Predicated region
    $region26: #{tpu_custom_call.1} parent=1 // pred_check
      %p632 = pneg %p631
    $region27: #{tpu_custom_call.1} parent=1 // pred_check_branch
      %634 = sbr.rel (%p632) target = $region29
    $region28: #{tpu_custom_call.1} parent=1 // pred_region
      %635 = vst [vmem:[#allocation8] sm:$0xff] %v623
      %636 = vst [vmem:[#allocation8 + $0x8] sm:$0xff] %v628
    $region29: #{tpu_custom_call.1} parent=1 // pred_fallthru
      _
    %p637 = scmp.gt.s32.totalorder 0, 0
    // Predicated region
    $region30: #{tpu_custom_call.1} parent=1 // pred_check
      %p638 = pneg %p637
    $region31: #{tpu_custom_call.1} parent=1 // pred_check_branch
      %640 = sbr.rel (%p638) target = $region33
    $region32: #{tpu_custom_call.1} parent=1 // pred_region
      %v641 = vld [vmem:[#allocation8] sm:$0xff]
      %v642 = vld [vmem:[#allocation8 + $0x8] sm:$0xff]
      %v643 = vadd.f32 %v641, %v623
      %v644 = vadd.f32 %v642, %v628
      %645 = vst [vmem:[#allocation8] sm:$0xff] %v643
      %646 = vst [vmem:[#allocation8 + $0x8] sm:$0xff] %v644
    $region33: #{tpu_custom_call.1} parent=1 // pred_fallthru
      _
    // Predicated region
    $region34: #{tpu_custom_call.1} parent=1 // pred_check
      _
    $region35: #{tpu_custom_call.1} parent=1 // pred_check_branch
      %648 = sbr.rel (0) target = $region37
    $region36: #{tpu_custom_call.1} parent=1 // pred_region
      %s650 = ssub.s32 256, 256
      %651 = vsyncadd [#allocation4], %s650
      %s652 = sshll.u32 [#allocation8], 4
      %s653 = int_to_ptr.vmem [resolvable:$true] %s652
      %658 = dma.vmem_to_hbm [thread:$0]  %s653, 256, %s3, [#allocation4], 128, 128, 8
    $region37: #{tpu_custom_call.1} parent=1 // pred_fallthru
      _
    // Predicated region
    $region38: #{tpu_custom_call.1} parent=1 // pred_check
      _
    $region39: #{tpu_custom_call.1} parent=1 // pred_check_branch
      %660 = sbr.rel (0) target = $region41
    $region40: #{tpu_custom_call.1} parent=1 // pred_region
      %661 = dma.done [#allocation4], 256
    $region41: #{tpu_custom_call.1} parent=1 // pred_fallthru
      _
    %662 = vsyncpa [#allocation3], 1
    %663 = vsyncpa [#allocation6], 1
    %664 = vsyncpa [#allocation4], 1

</llo_original>
